<compile_context>
chip_gen: v7x
topology: tpu7x:2x2x1
jax: 0.10.0
libtpu: 0.0.40
codegen_flags: <defaults>
</compile_context>

<pallas_src>
import functools

import jax
import jax.numpy as jnp
from jax.experimental import pallas as pl
from jax.experimental.pallas import tpu as pltpu

_LANES = 128


def _round_up(x, m):
    return ((x + m - 1) // m) * m


def _choose_tile_rows(n_rows, max_rows):
    """Row tile: multiple of 8 (or full extent); >= 2 grid steps when possible."""
    if n_rows <= max_rows:
        half_n = (n_rows + 1) // 2
        t = _round_up(half_n, 8)
        if 8 <= t < n_rows:
            return t
        return n_rows  # block == full extent is always layout-legal
    return max_rows    # max_rows is a multiple of 8 by construction


def _packed_rope_kernel(pos_ref, invf_ref, cos_ref, sin_ref, *,
                        dim, pos_per_row, scale):
    """Lane-dense path: each output row packs `pos_per_row` positions x dim lanes."""
    rows = pos_ref.shape[0]
    pos = pos_ref[...].astype(jnp.float32)            # (rows, P), torch .float()
    if pos_per_row == 1:
        pos_x = jnp.broadcast_to(pos[:, 0:1], (rows, _LANES))
    else:
        pieces = [jnp.broadcast_to(pos[:, i:i + 1], (rows, dim))
                  for i in range(pos_per_row)]
        pos_x = jnp.concatenate(pieces, axis=-1)       # (rows, 128), lane-dense
    # invf_ref already encodes emb = cat(freqs, freqs): lane l -> inv_freq[l % half]
    freqs = pos_x * invf_ref[...]                      # (rows,128) * (1,128)
    c = jnp.cos(freqs)
    s = jnp.sin(freqs)
    if scale != 1.0:
        c = c * scale
        s = s * scale
    cos_ref[...] = c.astype(cos_ref.dtype)             # full 128-lane stores
    sin_ref[...] = s.astype(sin_ref.dtype)


def _general_rope_kernel(pos_ref, invf_ref, cos_ref, sin_ref, *, scale):
    """Fallback path: rows = flattened positions, last dim = dim."""
    pos = pos_ref[...].astype(jnp.float32)             # (rows, 1)
    invf = invf_ref[...]                                # (1, half)
    freqs = pos * invf                                  # outer product (rows, half)
    c = jnp.cos(freqs)
    s = jnp.sin(freqs)
    # emb = cat(freqs, freqs): duplicate in registers (XLU), one full store each.
    c = jnp.concatenate([c, c], axis=-1)                # (rows, dim)
    s = jnp.concatenate([s, s], axis=-1)
    if scale != 1.0:
        c = c * scale
        s = s * scale
    cos_ref[...] = c.astype(cos_ref.dtype)
    sin_ref[...] = s.astype(sin_ref.dtype)


def sc_modernbert_rotary_embedding(x, position_ids, inv_freq,
                                   attention_scaling=1.0, max_tile_rows=4096):
    """JAX/Pallas equivalent of SCModernBertRotaryEmbedding.forward.

    x:            any array; only its dtype is consumed (like the torch module).
    position_ids: (B, S) integer array.
    inv_freq:     (dim/2,) float32.
    Returns (cos, sin), each (B, S, dim) in x.dtype.
    """
    B, S = position_ids.shape
    half = int(inv_freq.shape[0])
    dim = 2 * half
    out_dtype = x.dtype
    scale = float(attention_scaling)
    n = B * S
    inv_freq = inv_freq.astype(jnp.float32)

    compiler_params = pltpu.CompilerParams(
        dimension_semantics=("parallel",),
        vmem_limit_bytes=48 * 1024 * 1024,   # below v7x 64 MiB physical VMEM
    )

    use_packed = (dim <= _LANES) and (_LANES % dim == 0) \
        and (n % (_LANES // dim) == 0)

    if use_packed:
        p = _LANES // dim                 # positions per 128-lane output row
        n_rows = n // p
        tr = _choose_tile_rows(n_rows, max_tile_rows)
        grid = (pl.cdiv(n_rows, tr),)

        pos2 = position_ids.reshape(n_rows, p)                    # free reshape
        invf_row = jnp.tile(jnp.concatenate([inv_freq, inv_freq]), p)
        invf_row = invf_row.reshape(1, _LANES)                    # 512 B constant

        kernel = functools.partial(_packed_rope_kernel,
                                   dim=dim, pos_per_row=p, scale=scale)
        cos, sin = pl.pallas_call(
            kernel,
            out_shape=(jax.ShapeDtypeStruct((n_rows, _LANES), out_dtype),
                       jax.ShapeDtypeStruct((n_rows, _LANES), out_dtype)),
            grid=grid,
            in_specs=[
                pl.BlockSpec((tr, p), lambda i: (i, 0)),
                pl.BlockSpec((1, _LANES), lambda i: (0, 0)),
            ],
            out_specs=(
                pl.BlockSpec((tr, _LANES), lambda i: (i, 0)),
                pl.BlockSpec((tr, _LANES), lambda i: (i, 0)),
            ),
            compiler_params=compiler_params,
        )(pos2, invf_row)
        # Row-major reshape: (n_rows, 128) has exactly the (B, S, dim) element
        # order, so this is a metadata-only reshape (no extra HBM pass).
        return cos.reshape(B, S, dim), sin.reshape(B, S, dim)

    # ---- general fallback path (dim does not divide 128, or B*S not packable)
    target = max(8, (max_tile_rows * _LANES) // max(dim, 1))
    target = (target // 8) * 8
    tr = _choose_tile_rows(n, target)
    grid = (pl.cdiv(n, tr),)

    pos_col = position_ids.reshape(n, 1)
    invf2 = inv_freq.reshape(1, half)

    kernel = functools.partial(_general_rope_kernel, scale=scale)
    cos, sin = pl.pallas_call(
        kernel,
        out_shape=(jax.ShapeDtypeStruct((n, dim), out_dtype),
                   jax.ShapeDtypeStruct((n, dim), out_dtype)),
        grid=grid,
        in_specs=[
            pl.BlockSpec((tr, 1), lambda i: (i, 0)),
            pl.BlockSpec((1, half), lambda i: (0, 0)),
        ],
        out_specs=(
            pl.BlockSpec((tr, dim), lambda i: (i, 0)),
            pl.BlockSpec((tr, dim), lambda i: (i, 0)),
        ),
        compiler_params=compiler_params,
    )(pos_col, invf2)
    return cos.reshape(B, S, dim), sin.reshape(B, S, dim)


def make_default_inv_freq(dim: int, base: float):
    """Default ROPE_INIT_FUNCTIONS init (no rope_scaling)."""
    exponents = jnp.arange(0, dim, 2, dtype=jnp.float32) / float(dim)
    inv_freq = 1.0 / (jnp.float32(base) ** exponents)   # (dim/2,)
    attention_scaling = 1.0
    return inv_freq, attention_scaling


def _reference(x, position_ids, inv_freq, attention_scaling):
    freqs = position_ids.astype(jnp.float32)[:, :, None] * inv_freq[None, None, :]
    emb = jnp.concatenate([freqs, freqs], axis=-1)
    cos = (jnp.cos(emb) * attention_scaling).astype(x.dtype)
    sin = (jnp.sin(emb) * attention_scaling).astype(x.dtype)
    return cos, sin


def _check(x, position_ids, inv_freq, attention_scaling):
    cos, sin = sc_modernbert_rotary_embedding(x, position_ids, inv_freq,
                                              attention_scaling)
    cos = jax.block_until_ready(cos)
    sin = jax.block_until_ready(sin)

    cos_ref, sin_ref = _reference(x, position_ids, inv_freq, attention_scaling)

    B, S = position_ids.shape
    dim = 2 * int(inv_freq.shape[0])
    assert cos.shape == (B, S, dim) and sin.shape == (B, S, dim)
    assert cos.dtype == x.dtype and sin.dtype == x.dtype

    atol = 2e-2 if x.dtype == jnp.bfloat16 else 1e-4
    assert jnp.allclose(cos.astype(jnp.float32), cos_ref.astype(jnp.float32),
                        atol=atol, rtol=atol), "cos mismatch"
    assert jnp.allclose(sin.astype(jnp.float32), sin_ref.astype(jnp.float32),
                        atol=atol, rtol=atol), "sin mismatch"


if __name__ == "__main__":
    root = jax.random.PRNGKey(0)
    k1, k2, k3 = jax.random.split(root, 3)
    BASE = 10000.0

    # Case 1: packed fast path (dim=64 -> 2 positions per 128-lane row), tiny.
    B, S, DIM = 2, 8, 64
    x = jax.random.normal(k1, (B, S, DIM), dtype=jnp.bfloat16)
    pos = jnp.broadcast_to(jnp.arange(S, dtype=jnp.int32)[None, :], (B, S))
    inv_freq, attn_scale = make_default_inv_freq(DIM, BASE)
    _check(x, pos, inv_freq, attn_scale)

    # Case 2: packed path, multi-step grid with a partial tail tile and a
    # non-trivial attention_scaling, f32 output dtype.
    B2, S2, DIM2 = 2, 264, 64
    x2 = jax.random.normal(k2, (B2, S2, DIM2), dtype=jnp.float32)
    pos2 = jnp.broadcast_to(jnp.arange(S2, dtype=jnp.int32)[None, :], (B2, S2))
    inv_freq2, _ = make_default_inv_freq(DIM2, BASE)
    _check(x2, pos2, inv_freq2, 0.5)

    # Case 3: general fallback path (dim=96 does not divide 128), 2 grid steps.
    B3, S3, DIM3 = 2, 16, 96
    x3 = jax.random.normal(k3, (B3, S3, DIM3), dtype=jnp.bfloat16)
    pos3 = jnp.broadcast_to(jnp.arange(S3, dtype=jnp.int32)[None, :], (B3, S3))
    inv_freq3, attn_scale3 = make_default_inv_freq(DIM3, BASE)
    _check(x3, pos3, inv_freq3, attn_scale3)

    print("KERNEL_OK")
</pallas_src>

<mosaic_0001>
module attributes {stable_mosaic.version = 11 : i64} {
  func.func @_packed_rope_kernel(%arg0: i32, %arg1: memref<8x2xi32, #tpu.memory_space<vmem>>, %arg2: memref<1x128xf32, #tpu.memory_space<vmem>>, %arg3: memref<8x128xbf16, #tpu.memory_space<vmem>>, %arg4: memref<8x128xbf16, #tpu.memory_space<vmem>>) attributes {dimension_semantics = [#tpu.dimension_semantics<parallel>], iteration_bounds = array<i64: 1>, scalar_prefetch = 0 : i64, scratch_operands = 0 : i64, tpu.core_type = #tpu.core_type<tc>, window_params = [{transform_indices = @transform_0, window_bounds = array<i64: 8, 2>}, {pipeline_mode = #tpu.pipeline_mode<synchronous>, transform_indices = @transform_1, window_bounds = array<i64: 1, 128>}, {transform_indices = @transform_2, window_bounds = array<i64: 8, 128>}, {transform_indices = @transform_3, window_bounds = array<i64: 8, 128>}]} {
    %c0 = arith.constant 0 : index
    %c0_0 = arith.constant 0 : index
    %0 = vector.load %arg1[%c0, %c0_0] : memref<8x2xi32, #tpu.memory_space<vmem>>, vector<8x2xi32>
    %1 = arith.sitofp %0 : vector<8x2xi32> to vector<8x2xf32>
    %2 = vector.extract_strided_slice %1 {offsets = [0, 0], sizes = [8, 1], strides = [1, 1]} : vector<8x2xf32> to vector<8x1xf32>
    %3 = vector.shape_cast %2 : vector<8x1xf32> to vector<8x1xf32>
    %4 = vector.broadcast %3 : vector<8x1xf32> to vector<8x64xf32>
    %5 = vector.extract_strided_slice %1 {offsets = [0, 1], sizes = [8, 1], strides = [1, 1]} : vector<8x2xf32> to vector<8x1xf32>
    %6 = vector.shape_cast %5 : vector<8x1xf32> to vector<8x1xf32>
    %7 = vector.broadcast %6 : vector<8x1xf32> to vector<8x64xf32>
    %8 = tpu.concatenate %4, %7 in 1 : vector<8x64xf32>, vector<8x64xf32> -> vector<8x128xf32>
    %c0_1 = arith.constant 0 : index
    %c0_2 = arith.constant 0 : index
    %9 = vector.load %arg2[%c0_1, %c0_2] : memref<1x128xf32, #tpu.memory_space<vmem>>, vector<1x128xf32>
    %10 = vector.broadcast %9 : vector<1x128xf32> to vector<8x128xf32>
    %11 = arith.mulf %8, %10 : vector<8x128xf32>
    %12 = math.cos %11 : vector<8x128xf32>
    %13 = math.sin %11 : vector<8x128xf32>
    %14 = arith.truncf %12 : vector<8x128xf32> to vector<8x128xbf16>
    %c0_3 = arith.constant 0 : index
    %c0_4 = arith.constant 0 : index
    %15 = vector.load %arg3[%c0_3, %c0_4] : memref<8x128xbf16, #tpu.memory_space<vmem>>, vector<8x128xbf16>
    tpu.vector_store %arg3[%c0_3, %c0_4], %14 {strides = array<i32>} : memref<8x128xbf16, #tpu.memory_space<vmem>>, vector<8x128xbf16>,
    %16 = arith.truncf %13 : vector<8x128xf32> to vector<8x128xbf16>
    %c0_5 = arith.constant 0 : index
    %c0_6 = arith.constant 0 : index
    %17 = vector.load %arg4[%c0_5, %c0_6] : memref<8x128xbf16, #tpu.memory_space<vmem>>, vector<8x128xbf16>
    tpu.vector_store %arg4[%c0_5, %c0_6], %16 {strides = array<i32>} : memref<8x128xbf16, #tpu.memory_space<vmem>>, vector<8x128xbf16>,
    return
  }
  func.func @transform_0(%arg0: i32) -> (i32, i32) {
    %c0_i32 = arith.constant 0 : i32
    %c0_i32_0 = arith.constant 0 : i32
    return %arg0, %c0_i32 : i32, i32
  }
  func.func @transform_1(%arg0: i32) -> (i32, i32) {
    %c0_i32 = arith.constant 0 : i32
    %c0_i32_0 = arith.constant 0 : i32
    %c0_i32_1 = arith.constant 0 : i32
    return %c0_i32, %c0_i32_0 : i32, i32
  }
  func.func @transform_2(%arg0: i32) -> (i32, i32) {
    %c0_i32 = arith.constant 0 : i32
    %c0_i32_0 = arith.constant 0 : i32
    return %arg0, %c0_i32 : i32, i32
  }
  func.func @transform_3(%arg0: i32) -> (i32, i32) {
    %c0_i32 = arith.constant 0 : i32
    %c0_i32_0 = arith.constant 0 : i32
    return %arg0, %c0_i32 : i32, i32
  }
}

</mosaic_0001>

<llo_original>
// kernel: tpu_custom_call.1
$region0: #{tpu_custom_call.1}
  #allocation0 [shape = 'u32[]', space=smem, size = 0x4, offset = 0x4, fixed_abs, tag = 'smem constant byte address 0x4 - core index']
  #allocation1 [shape = 'u32[144,128]{1,0:T(1,128)}', space=vmem, size = 0x12000, scoped, tag = 'internal scratch']
  %s0 = inlined_call_operand.vmem [shape: s32[8,2], index: 0, kind: input, shape index: {}]
  %s1 = inlined_call_operand.vmem [shape: f32[1,128], index: 1, kind: input, shape index: {}]
  %s2 = inlined_call_operand.hbm [shape: bf16[8,128], index: 2, kind: output, shape index: {0}]
  %s3 = inlined_call_operand.hbm [shape: bf16[8,128], index: 3, kind: output, shape index: {1}]
  %4 = xla_tuple %s2, %s3
  %s5 = sld [smem:[#allocation0]]
  $region26: #{tpu_custom_call.1} parent=0
    _
  %s7 = ssub.s32 1, %s5
  %s8 = scalar_select 0, %s7, %s5
  $region1: #{tpu_custom_call.1} parent=0
    #allocation2 [shape = 'u8[2048]{0}', space=vmem, size = 0x800, scoped, tag = 'output window, operand 0, single buffered']
    #allocation3 [shape = 's32[1]{0}', space=sflag, size = 0x4, scoped, tag = 'scoped memory for tpu_custom_call.1']
    #allocation4 [shape = 'u8[2048]{0}', space=vmem, size = 0x800, scoped, tag = 'output window, operand 1, single buffered']
    #allocation5 [shape = 's32[1]{0}', space=sflag, size = 0x4, scoped, tag = 'scoped memory for tpu_custom_call.1']
    %9 = vsyncpa [#allocation3], 0
    %10 = vsyncpa [#allocation5], 0
    // Predicated region
    $region2: #{tpu_custom_call.1} parent=1 // pred_check
      _
    $region3: #{tpu_custom_call.1} parent=1 // pred_check_branch
      %12 = sbr.rel (0) target = $region5
    $region4: #{tpu_custom_call.1} parent=1 // pred_region
      _
    $region5: #{tpu_custom_call.1} parent=1 // pred_fallthru
      _
    // Predicated region
    $region6: #{tpu_custom_call.1} parent=1 // pred_check
      _
    $region7: #{tpu_custom_call.1} parent=1 // pred_check_branch
      %14 = sbr.rel (0) target = $region9
    $region8: #{tpu_custom_call.1} parent=1 // pred_region
      _
    $region9: #{tpu_custom_call.1} parent=1 // pred_fallthru
      _
    %v15 = vld [vmem:[%s0] sm:$0xff]
    %v16 = vcvt.s32.f32 %v15
    %18 = vset.pattern.permute.xlu0 0
    %19 = vperm.xlu0 %18, %v16
    %v20 = vpop.permute.xlu0 %19
    %22 = vset.pattern.permute.xlu0 1
    %23 = vperm.xlu0 %22, %v16
    %v24 = vpop.permute.xlu0 %23
    %vm26 = vcmask 523264
    %v27 = vsel %vm26, %v20, %v24
    %v28 = vld [vmem:[%s1] sm:$0x1]
    %v30 = vlaneseq
    %v31 = vshrl.u32 %v30, 7
    %v32 = vsub.s32 0, %v31
    %v33 = vrot.slane %v28, %v32
    %v35 = vmul.f32 %v27, %v33
    %v36 = vand.u32 2147483647, %v35
    %vm37 = vcmp.le.f32.partialorder %v36, 0.7853982
    %vm38 = vcmp.lt.s32.totalorder %v35, 0
    %v39 = vand.u32 %v35, 2139095040
    %v40 = vshrl.u32 %v39, 23
    %v41 = vsub.s32 %v40, 127
    %v42 = vand.u32 2147483647, %v35
    %v43 = vand.u32 %v42, 8388607
    %v44 = vor.u32 %v43, 8388608
    %v45 = vsub.s32 0, %v44
    %v46 = vadd.s32 %v41, 1
    %vm47 = vcmp.gt.s32.totalorder %v46, 0
    %v48 = vsel %vm47, %v46, 0
    %v49 = vshrl.u32 %v48, 5
    %v50 = vand.u32 %v48, 31
    %v51 = vsub.s32 32, %v50
    %v52 = vshrl.u32 683565275, %v51
    %v53 = vshll.u32 683565275, %v50
    %v54 = vshrl.u32 2475754826, %v51
    %v55 = vor.u32 %v53, %v54
    %v56 = vshll.u32 2475754826, %v50
    %v57 = vshrl.u32 2131351028, %v51
    %v58 = vor.u32 %v56, %v57
    %v59 = vshll.u32 2131351028, %v50
    %v60 = vshrl.u32 2102212464, %v51
    %v61 = vor.u32 %v59, %v60
    %v62 = vshll.u32 2102212464, %v50
    %v63 = vshrl.u32 920167782, %v51
    %v64 = vor.u32 %v62, %v63
    %v65 = vshll.u32 920167782, %v50
    %v66 = vshrl.u32 1326507024, %v51
    %v67 = vor.u32 %v65, %v66
    %vm68 = vcmp.lt.s32.totalorder %v49, 1
    %vm69 = vcmp.lt.s32.totalorder %v49, 2
    %vm70 = vcmp.lt.s32.totalorder %v49, 3
    %vm71 = vcmp.lt.s32.totalorder %v49, 4
    %v72 = vsel %vm68, %v52, %v55
    %v73 = vsel %vm71, %v61, 2102212464
    %v74 = vsel %vm70, %v58, %v73
    %v75 = vsel %vm69, %v72, %v74
    %v76 = vsel %vm68, %v55, %v58
    %v77 = vsel %vm71, %v64, 920167782
    %v78 = vsel %vm70, %v61, %v77
    %v79 = vsel %vm69, %v76, %v78
    %v80 = vsel %vm68, %v58, %v61
    %v81 = vsel %vm71, %v67, 1326507024
    %v82 = vsel %vm70, %v64, %v81
    %v83 = vsel %vm69, %v80, %v82
    %v84 = vshll.u32 %v44, 8
    %v85 = vmul.u32.u64.compose %v84, %v83
    %v86 = vextract.low.u32 %v85
    %v87 = vextract.high.u32 %v85
    %v88 = vmul.u32.u64.compose %v84, %v79
    %v89 = vextract.low.u32 %v88
    %v90 = vextract.high.u32 %v88
    %v91 = vmul.u32 %v84, %v75
    %v92 = vadd.s32 %v87, %v89
    %vm93 = vc.u32 %v87, %v89
    %v94 = vadd.s32 %v90, 1
    %v95 = vsel %vm93, %v94, %v90
    %v96 = vadd.s32 %v91, %v95
    %v97 = vadd.s32 %v96, 536870912
    %v98 = vshrl.u32 %v97, 30
    %v99 = vshll.u32 %v98, 30
    %v100 = vsub.s32 %v96, %v99
    %vm101 = vcmp.lt.s32.totalorder %v100, 0
    %v102 = vsub.s32 0, %v100
    %v103 = vsel %vm101, %v102, %v100
    %v104 = vclz %v103
    %v105 = vsub.s32 %v104, 2
    %vm106 = vcmp.gt.s32.totalorder 0, %v105
    %v107 = vsel %vm106, 0, %v105
    %v108 = vsub.s32 32, %v107
    %v109 = vshll.u32 %v100, %v107
    %v110 = vshrl.u32 %v92, %v108
    %v111 = vor.u32 %v109, %v110
    %v112 = vsub.s32 4294967266, %v107
    %v113 = vadd.s32 %v112, 127
    %v114 = vshll.u32 %v113, 23
    %v115 = vor.u32 4788187, %v114
    %v116 = vand.u32 2147483647, %v115
    %v118 = vcvt.s32.f32 %v111
    %v119 = vmul.f32 %v118, %v116
    %v120 = vxor.u32 %v119, 2147483648
    %v121 = vsel %vm38, %v120, %v119
    %v122 = vsub.s32 4, %v98
    %v123 = vsel %vm38, %v122, %v98
    %v124 = vsel %vm37, %v35, %v121
    %v125 = vsel %vm37, 0, %v123
    %v126 = vcosq.f32.pop %v124
    %v127 = vsinq.f32.pop %v124
    %vm128 = vweird.f32 %v35
    %v129 = vand.u32 %v125, 3
    %vm130 = vcmp.lt.s32.totalorder %v129, 2
    %vm131 = vcmp.eq.s32.totalorder %v129, 0
    %v132 = vxor.u32 %v127, 2147483648
    %v133 = vsel %vm131, %v126, %v132
    %vm134 = vcmp.eq.s32.totalorder %v129, 2
    %v135 = vxor.u32 %v126, 2147483648
    %v136 = vsel %vm134, %v135, %v127
    %v137 = vsel %vm130, %v133, %v136
    %v138 = vsel %vm128, nan, %v137
    %v139 = vand.u32 2147483647, %v35
    %vm140 = vcmp.le.f32.partialorder %v139, 0.7853982
    %vm141 = vcmp.lt.s32.totalorder %v35, 0
    %v142 = vand.u32 %v35, 2139095040
    %v143 = vshrl.u32 %v142, 23
    %v144 = vsub.s32 %v143, 127
    %v145 = vand.u32 2147483647, %v35
    %v146 = vand.u32 %v145, 8388607
    %v147 = vor.u32 %v146, 8388608
    %v148 = vsub.s32 0, %v147
    %v149 = vadd.s32 %v144, 1
    %vm150 = vcmp.gt.s32.totalorder %v149, 0
    %v151 = vsel %vm150, %v149, 0
    %v152 = vshrl.u32 %v151, 5
    %v153 = vand.u32 %v151, 31
    %v154 = vsub.s32 32, %v153
    %v155 = vshrl.u32 683565275, %v154
    %v156 = vshll.u32 683565275, %v153
    %v157 = vshrl.u32 2475754826, %v154
    %v158 = vor.u32 %v156, %v157
    %v159 = vshll.u32 2475754826, %v153
    %v160 = vshrl.u32 2131351028, %v154
    %v161 = vor.u32 %v159, %v160
    %v162 = vshll.u32 2131351028, %v153
    %v163 = vshrl.u32 2102212464, %v154
    %v164 = vor.u32 %v162, %v163
    %v165 = vshll.u32 2102212464, %v153
    %v166 = vshrl.u32 920167782, %v154
    %v167 = vor.u32 %v165, %v166
    %v168 = vshll.u32 920167782, %v153
    %v169 = vshrl.u32 1326507024, %v154
    %v170 = vor.u32 %v168, %v169
    %vm171 = vcmp.lt.s32.totalorder %v152, 1
    %vm172 = vcmp.lt.s32.totalorder %v152, 2
    %vm173 = vcmp.lt.s32.totalorder %v152, 3
    %vm174 = vcmp.lt.s32.totalorder %v152, 4
    %v175 = vsel %vm171, %v155, %v158
    %v176 = vsel %vm174, %v164, 2102212464
    %v177 = vsel %vm173, %v161, %v176
    %v178 = vsel %vm172, %v175, %v177
    %v179 = vsel %vm171, %v158, %v161
    %v180 = vsel %vm174, %v167, 920167782
    %v181 = vsel %vm173, %v164, %v180
    %v182 = vsel %vm172, %v179, %v181
    %v183 = vsel %vm171, %v161, %v164
    %v184 = vsel %vm174, %v170, 1326507024
    %v185 = vsel %vm173, %v167, %v184
    %v186 = vsel %vm172, %v183, %v185
    %v187 = vshll.u32 %v147, 8
    %v188 = vmul.u32.u64.compose %v187, %v186
    %v189 = vextract.low.u32 %v188
    %v190 = vextract.high.u32 %v188
    %v191 = vmul.u32.u64.compose %v187, %v182
    %v192 = vextract.low.u32 %v191
    %v193 = vextract.high.u32 %v191
    %v194 = vmul.u32 %v187, %v178
    %v195 = vadd.s32 %v190, %v192
    %vm196 = vc.u32 %v190, %v192
    %v197 = vadd.s32 %v193, 1
    %v198 = vsel %vm196, %v197, %v193
    %v199 = vadd.s32 %v194, %v198
    %v200 = vadd.s32 %v199, 536870912
    %v201 = vshrl.u32 %v200, 30
    %v202 = vshll.u32 %v201, 30
    %v203 = vsub.s32 %v199, %v202
    %vm204 = vcmp.lt.s32.totalorder %v203, 0
    %v205 = vsub.s32 0, %v203
    %v206 = vsel %vm204, %v205, %v203
    %v207 = vclz %v206
    %v208 = vsub.s32 %v207, 2
    %vm209 = vcmp.gt.s32.totalorder 0, %v208
    %v210 = vsel %vm209, 0, %v208
    %v211 = vsub.s32 32, %v210
    %v212 = vshll.u32 %v203, %v210
    %v213 = vshrl.u32 %v195, %v211
    %v214 = vor.u32 %v212, %v213
    %v215 = vsub.s32 4294967266, %v210
    %v216 = vadd.s32 %v215, 127
    %v217 = vshll.u32 %v216, 23
    %v218 = vor.u32 4788187, %v217
    %v219 = vand.u32 2147483647, %v218
    %v221 = vcvt.s32.f32 %v214
    %v222 = vmul.f32 %v221, %v219
    %v223 = vxor.u32 %v222, 2147483648
    %v224 = vsel %vm141, %v223, %v222
    %v225 = vsub.s32 4, %v201
    %v226 = vsel %vm141, %v225, %v201
    %v227 = vsel %vm140, %v35, %v224
    %v228 = vsel %vm140, 0, %v226
    %v229 = vcosq.f32.pop %v227
    %v230 = vsinq.f32.pop %v227
    %vm231 = vweird.f32 %v35
    %v232 = vadd.s32 %v228, 3
    %v233 = vand.u32 %v232, 3
    %vm234 = vcmp.lt.s32.totalorder %v233, 2
    %vm235 = vcmp.eq.s32.totalorder %v233, 0
    %v236 = vxor.u32 %v230, 2147483648
    %v237 = vsel %vm235, %v229, %v236
    %vm238 = vcmp.eq.s32.totalorder %v233, 2
    %v239 = vxor.u32 %v229, 2147483648
    %v240 = vsel %vm238, %v239, %v230
    %v241 = vsel %vm234, %v237, %v240
    %v242 = vsel %vm231, nan, %v241
    %v243 = vpack.c.bf16 %v138, %v138
    %244 = vst [vmem:[#allocation2] sm:$0xf] %v243
    %v245 = vpack.c.bf16 %v242, %v242
    %246 = vst [vmem:[#allocation4] sm:$0xf] %v245
    // Predicated region
    $region10: #{tpu_custom_call.1} parent=1 // pred_check
      _
    $region11: #{tpu_custom_call.1} parent=1 // pred_check_branch
      %248 = sbr.rel (0) target = $region13
    $region12: #{tpu_custom_call.1} parent=1 // pred_region
      %s250 = ssub.s32 64, 64
      %251 = vsyncadd [#allocation3], %s250
      %s253 = sshll.u32 [#allocation2], 4
      %s254 = int_to_ptr.vmem [resolvable:$true] %s253
      %256 = dma.vmem_to_hbm [thread:$0]  %s254, 64, %s2, [#allocation3]
    $region13: #{tpu_custom_call.1} parent=1 // pred_fallthru
      _
    // Predicated region
    $region14: #{tpu_custom_call.1} parent=1 // pred_check
      _
    $region15: #{tpu_custom_call.1} parent=1 // pred_check_branch
      %258 = sbr.rel (0) target = $region17
    $region16: #{tpu_custom_call.1} parent=1 // pred_region
      %s260 = ssub.s32 64, 64
      %261 = vsyncadd [#allocation5], %s260
      %s263 = sshll.u32 [#allocation4], 4
      %s264 = int_to_ptr.vmem [resolvable:$true] %s263
      %266 = dma.vmem_to_hbm [thread:$0]  %s264, 64, %s3, [#allocation5]
    $region17: #{tpu_custom_call.1} parent=1 // pred_fallthru
      _
    // Predicated region
    $region18: #{tpu_custom_call.1} parent=1 // pred_check
      _
    $region19: #{tpu_custom_call.1} parent=1 // pred_check_branch
      %268 = sbr.rel (0) target = $region21
    $region20: #{tpu_custom_call.1} parent=1 // pred_region
      %269 = dma.done [#allocation3], 64
    $region21: #{tpu_custom_call.1} parent=1 // pred_fallthru
      _
    // Predicated region
    $region22: #{tpu_custom_call.1} parent=1 // pred_check
      _
    $region23: #{tpu_custom_call.1} parent=1 // pred_check_branch
      %271 = sbr.rel (0) target = $region25
    $region24: #{tpu_custom_call.1} parent=1 // pred_region
      %272 = dma.done [#allocation5], 64
    $region25: #{tpu_custom_call.1} parent=1 // pred_fallthru
      _
    %273 = vsyncpa [#allocation3], 1
    %274 = vsyncpa [#allocation5], 1

</llo_original>
